<compile_context>
chip_gen: v5e
topology: v5e:2x2
jax: 0.10.0
libtpu: 0.0.40
codegen_flags: <defaults>
</compile_context>

<pallas_src>
import math

import jax
import jax.numpy as jnp
from jax.experimental import pallas as pl
from jax.experimental.pallas import tpu as pltpu

HEADS = 4
D_MODEL = 32
SEQ = 8
BATCH = 2

_FALLBACK_VMEM_BYTES = 64 * 1024 * 1024  # v7x per-TC VMEM (smallest of the gens)


def _vmem_capacity_bytes():
    try:
        return int(pltpu.get_tpu_info().vmem_capacity_bytes)
    except Exception:
        return _FALLBACK_VMEM_BYTES


def _pick_block_b(B, S, D, vmem_cap, itemsize=4):
    """Batch-tile size: big enough to amortize per-step overhead, small enough
    to fit double-buffered blocks + temporaries in VMEM on every generation."""
    row_bytes = S * D * itemsize                      # one batch row, one operand
    # ~2 MiB per input block amortizes the ~0.35 us per-step pipeline overhead.
    target = max(1, (2 << 20) // row_bytes)
    # Per batch row: 2x double-buffered (q, k, v, out) blocks + score/prob temps.
    per_row = 2 * 4 * row_bytes + 2 * S * S * itemsize
    budget = max(per_row, vmem_cap // 2)
    cap = max(1, budget // per_row)
    return int(max(1, min(B, target, cap)))


def _make_mha_kernel(heads, d_k, scale, with_mask, matmul_dtype):
    def kernel(*refs):
        if with_mask:
            addm_ref, q_ref, k_ref, v_ref, o_ref = refs
        else:
            q_ref, k_ref, v_ref, o_ref = refs

        q = q_ref[...] * scale                        # fold 1/sqrt(d_k) once
        k = k_ref[...]
        v = v_ref[...]
        tb, s_len, _ = q.shape

        if with_mask:
            # Additive f32 mask (0 / -1e9) precomputed in the wrapper; broadcast
            # it ONCE here (JAX does not CSE broadcast_in_dim inside the loop).
            addm = jnp.broadcast_to(addm_ref[...][None, :, :], (tb, s_len, s_len))

        for h in range(heads):                        # static loop, small H
            lo = h * d_k
            qh = q[:, :, lo:lo + d_k].astype(matmul_dtype)
            kh = k[:, :, lo:lo + d_k].astype(matmul_dtype)
            vh = v[:, :, lo:lo + d_k]
            s = jnp.einsum('bqd,bkd->bqk', qh, kh,
                           preferred_element_type=jnp.float32)
            if with_mask:
                s = s + addm
            # f32 softmax with max-subtraction; EUP approx reciprocal instead
            # of a VPU divide for the normalization.
            s = s - jnp.max(s, axis=-1, keepdims=True)
            ex = jnp.exp(s)
            p = ex * pl.reciprocal(jnp.sum(ex, axis=-1, keepdims=True), approx=True)
            # TODO(synk): dropout on the attention probabilities is omitted
            # (inference / identity); training would use pltpu.prng_seed +
            # pltpu.stateful_bernoulli.
            oh = jnp.einsum('bqk,bkd->bqd',
                            p.astype(matmul_dtype), vh.astype(matmul_dtype),
                            preferred_element_type=jnp.float32)
            # Direct per-head lane-sliced store: no lane concat / relayout and
            # no H live head outputs kept alive to the end of the loop.
            o_ref[:, :, lo:lo + d_k] = oh.astype(o_ref.dtype)

    return kernel


def multihead_attention_forward(q, k, v, mask=None, *, heads=HEADS,
                                block_b=None, matmul_dtype=None):
    """q, k, v: (B, S, d_model) float32 -> (B, S, d_model) float32."""
    B, S, D = q.shape
    assert k.shape == (B, S, D) and v.shape == (B, S, D)
    assert D % heads == 0
    d_k = D // heads
    scale = 1.0 / math.sqrt(d_k)

    vmem_cap = _vmem_capacity_bytes()
    if block_b is None:
        block_b = _pick_block_b(B, S, D, vmem_cap)
    grid_b = pl.cdiv(B, block_b)

    if matmul_dtype is None:
        # bf16 MXU operands pay off on v6e/v7x once the contractions are
        # non-trivial; stay exact f32 at toy sequence lengths (and this keeps
        # all softmax/elementwise math in f32 for v5e either way).
        matmul_dtype = jnp.bfloat16 if S >= 128 else jnp.float32

    with_mask = mask is not None
    kernel = _make_mha_kernel(heads, d_k, scale, with_mask, matmul_dtype)

    qkv_spec = pl.BlockSpec((block_b, S, D), lambda i: (i, 0, 0))
    in_specs = [qkv_spec, qkv_spec, qkv_spec]
    args = [q, k, v]
    if with_mask:
        # Precompute the additive mask once in the wrapper: one compare+select
        # total instead of per-head / per-grid-step inside the kernel.
        addm = jnp.where(jnp.asarray(mask).reshape(S, S) == 0,
                         jnp.float32(-1e9), jnp.float32(0.0))
        in_specs = [pl.BlockSpec((S, S), lambda i: (0, 0))] + in_specs  # resident
        args = [addm] + args

    # VMEM need: double-buffered q/k/v/out blocks + score temporaries + mask,
    # with headroom, clamped to the device capacity (64 MiB/TC on v7x).
    blk_bytes = block_b * S * D * 4
    need = 2 * 4 * blk_bytes + 2 * block_b * S * S * 4 + 2 * S * S * 4
    vmem_limit = int(min(int(0.9 * vmem_cap), max(32 << 20, int(1.5 * need))))

    # No jnp.pad for batch tails: Pallas masks the ragged last block (rows are
    # independent, overhanging reads can't contaminate kept rows, overhanging
    # writes are dropped).  For the shipped shapes block_b == B -> grid=(1,).
    out = pl.pallas_call(
        kernel,
        out_shape=jax.ShapeDtypeStruct((B, S, D), q.dtype),
        grid=(grid_b,),
        in_specs=in_specs,
        out_specs=pl.BlockSpec((block_b, S, D), lambda i: (i, 0, 0)),
        compiler_params=pltpu.CompilerParams(
            dimension_semantics=("parallel",),
            vmem_limit_bytes=vmem_limit,
        ),
    )(*args)
    return out


def _mha_reference(q, k, v, heads, mask=None):
    B, S, D = q.shape
    d_k = D // heads
    qh = q.reshape(B, S, heads, d_k).transpose(0, 2, 1, 3)
    kh = k.reshape(B, S, heads, d_k).transpose(0, 2, 1, 3)
    vh = v.reshape(B, S, heads, d_k).transpose(0, 2, 1, 3)
    s = jnp.einsum('bhqd,bhkd->bhqk', qh, kh) / math.sqrt(d_k)
    if mask is not None:
        s = jnp.where(mask[None, None, :, :] == 0, -1e9, s)
    p = jax.nn.softmax(s, axis=-1)
    o = jnp.einsum('bhqk,bhkd->bhqd', p, vh)
    return o.transpose(0, 2, 1, 3).reshape(B, S, D)


if __name__ == "__main__":
    key = jax.random.PRNGKey(0)
    k_q, k_k, k_v = jax.random.split(key, 3)

    B, S, D = BATCH, SEQ, D_MODEL
    q = jax.random.normal(k_q, (B, S, D), dtype=jnp.float32)
    k = jax.random.normal(k_k, (B, S, D), dtype=jnp.float32)
    v = jax.random.normal(k_v, (B, S, D), dtype=jnp.float32)

    # mask=None path (matches the module's default call).
    out = multihead_attention_forward(q, k, v, heads=HEADS)
    out = jax.block_until_ready(out)
    ref = _mha_reference(q, k, v, HEADS)
    assert out.shape == (B, S, D)
    assert jnp.allclose(out, ref, atol=2e-2, rtol=2e-2)

    # masked path (causal mask), mirroring scores.masked_fill(mask == 0, -1e9).
    mask = jnp.tril(jnp.ones((S, S), dtype=jnp.int32))
    out_m = multihead_attention_forward(q, k, v, mask, heads=HEADS)
    out_m = jax.block_until_ready(out_m)
    ref_m = _mha_reference(q, k, v, HEADS, mask=mask)
    assert jnp.allclose(out_m, ref_m, atol=2e-2, rtol=2e-2)

    print("KERNEL_OK")
</pallas_src>

<mosaic_0001>
module attributes {stable_mosaic.version = 11 : i64} {
  func.func @kernel(%arg0: i32, %arg1: memref<2x8x32xf32, #tpu.memory_space<vmem>>, %arg2: memref<2x8x32xf32, #tpu.memory_space<vmem>>, %arg3: memref<2x8x32xf32, #tpu.memory_space<vmem>>, %arg4: memref<2x8x32xf32, #tpu.memory_space<vmem>>) attributes {dimension_semantics = [#tpu.dimension_semantics<parallel>], iteration_bounds = array<i64: 1>, scalar_prefetch = 0 : i64, scratch_operands = 0 : i64, tpu.core_type = #tpu.core_type<tc>, window_params = [{transform_indices = @transform_0, window_bounds = array<i64: 2, 8, 32>}, {transform_indices = @transform_1, window_bounds = array<i64: 2, 8, 32>}, {transform_indices = @transform_2, window_bounds = array<i64: 2, 8, 32>}, {transform_indices = @transform_3, window_bounds = array<i64: 2, 8, 32>}]} {
    %c0 = arith.constant 0 : index
    %c0_0 = arith.constant 0 : index
    %c0_1 = arith.constant 0 : index
    %0 = vector.load %arg1[%c0, %c0_0, %c0_1] : memref<2x8x32xf32, #tpu.memory_space<vmem>>, vector<2x8x32xf32>
    %cst = arith.constant 0.353553385 : f32
    %1 = vector.broadcast %cst : f32 to vector<2x8x32xf32>
    %2 = arith.mulf %0, %1 : vector<2x8x32xf32>
    %c0_2 = arith.constant 0 : index
    %c0_3 = arith.constant 0 : index
    %c0_4 = arith.constant 0 : index
    %3 = vector.load %arg2[%c0_2, %c0_3, %c0_4] : memref<2x8x32xf32, #tpu.memory_space<vmem>>, vector<2x8x32xf32>
    %c0_5 = arith.constant 0 : index
    %c0_6 = arith.constant 0 : index
    %c0_7 = arith.constant 0 : index
    %4 = vector.load %arg3[%c0_5, %c0_6, %c0_7] : memref<2x8x32xf32, #tpu.memory_space<vmem>>, vector<2x8x32xf32>
    %5 = vector.extract_strided_slice %2 {offsets = [0, 0, 0], sizes = [2, 8, 8], strides = [1, 1, 1]} : vector<2x8x32xf32> to vector<2x8x8xf32>
    %6 = vector.extract_strided_slice %3 {offsets = [0, 0, 0], sizes = [2, 8, 8], strides = [1, 1, 1]} : vector<2x8x32xf32> to vector<2x8x8xf32>
    %7 = vector.extract_strided_slice %4 {offsets = [0, 0, 0], sizes = [2, 8, 8], strides = [1, 1, 1]} : vector<2x8x32xf32> to vector<2x8x8xf32>
    "tpu.trace_start"() <{level = 10 : i32, message = "bqd,bkd->bqk"}> : () -> ()
    %cst_8 = arith.constant dense<0.000000e+00> : vector<2x8x8xf32>
    %8 = tpu.matmul %5, %6, %cst_8 {dimension_numbers = #tpu.dot_dimension_numbers<[2], [2], [1], [1], [0, 0, 0, 1, 1, 1], [0], [0]>} : vector<2x8x8xf32>, vector<2x8x8xf32>, vector<2x8x8xf32> -> vector<2x8x8xf32>
    "tpu.trace_stop"() : () -> ()
    %cst_9 = arith.constant dense<0xFF800000> : vector<2x8xf32>
    %9 = vector.multi_reduction <maximumf>, %8, %cst_9 [2] : vector<2x8x8xf32> to vector<2x8xf32>
    %10 = vector.shape_cast %9 : vector<2x8xf32> to vector<2x8x1xf32>
    %11 = vector.broadcast %10 : vector<2x8x1xf32> to vector<2x8x8xf32>
    %12 = arith.subf %8, %11 : vector<2x8x8xf32>
    %13 = math.exp %12 : vector<2x8x8xf32>
    %cst_10 = arith.constant dense<0.000000e+00> : vector<2x8xf32>
    %14 = vector.multi_reduction <add>, %13, %cst_10 [2] : vector<2x8x8xf32> to vector<2x8xf32>
    %15 = vector.shape_cast %14 : vector<2x8xf32> to vector<2x8x1xf32>
    %16 = tpu.reciprocal %15 {approx = true} : vector<2x8x1xf32> -> vector<2x8x1xf32>
    %17 = vector.broadcast %16 : vector<2x8x1xf32> to vector<2x8x8xf32>
    %18 = arith.mulf %13, %17 : vector<2x8x8xf32>
    "tpu.trace_start"() <{level = 10 : i32, message = "bqk,bkd->bqd"}> : () -> ()
    %cst_11 = arith.constant dense<0.000000e+00> : vector<2x8x8xf32>
    %19 = tpu.matmul %18, %7, %cst_11 {dimension_numbers = #tpu.dot_dimension_numbers<[2], [1], [1], [2], [0, 0, 0, 1, 1, 2], [0], [0]>} : vector<2x8x8xf32>, vector<2x8x8xf32>, vector<2x8x8xf32> -> vector<2x8x8xf32>
    "tpu.trace_stop"() : () -> ()
    %c0_12 = arith.constant 0 : index
    %c0_13 = arith.constant 0 : index
    %c0_14 = arith.constant 0 : index
    %20 = vector.load %arg4[%c0_12, %c0_13, %c0_14] : memref<2x8x32xf32, #tpu.memory_space<vmem>>, vector<2x8x8xf32>
    tpu.vector_store %arg4[%c0_12, %c0_13, %c0_14], %19 {strides = array<i32>} : memref<2x8x32xf32, #tpu.memory_space<vmem>>, vector<2x8x8xf32>,
    %21 = vector.extract_strided_slice %2 {offsets = [0, 0, 8], sizes = [2, 8, 8], strides = [1, 1, 1]} : vector<2x8x32xf32> to vector<2x8x8xf32>
    %22 = vector.extract_strided_slice %3 {offsets = [0, 0, 8], sizes = [2, 8, 8], strides = [1, 1, 1]} : vector<2x8x32xf32> to vector<2x8x8xf32>
    %23 = vector.extract_strided_slice %4 {offsets = [0, 0, 8], sizes = [2, 8, 8], strides = [1, 1, 1]} : vector<2x8x32xf32> to vector<2x8x8xf32>
    "tpu.trace_start"() <{level = 10 : i32, message = "bqd,bkd->bqk"}> : () -> ()
    %cst_15 = arith.constant dense<0.000000e+00> : vector<2x8x8xf32>
    %24 = tpu.matmul %21, %22, %cst_15 {dimension_numbers = #tpu.dot_dimension_numbers<[2], [2], [1], [1], [0, 0, 0, 1, 1, 1], [0], [0]>} : vector<2x8x8xf32>, vector<2x8x8xf32>, vector<2x8x8xf32> -> vector<2x8x8xf32>
    "tpu.trace_stop"() : () -> ()
    %cst_16 = arith.constant dense<0xFF800000> : vector<2x8xf32>
    %25 = vector.multi_reduction <maximumf>, %24, %cst_16 [2] : vector<2x8x8xf32> to vector<2x8xf32>
    %26 = vector.shape_cast %25 : vector<2x8xf32> to vector<2x8x1xf32>
    %27 = vector.broadcast %26 : vector<2x8x1xf32> to vector<2x8x8xf32>
    %28 = arith.subf %24, %27 : vector<2x8x8xf32>
    %29 = math.exp %28 : vector<2x8x8xf32>
    %cst_17 = arith.constant dense<0.000000e+00> : vector<2x8xf32>
    %30 = vector.multi_reduction <add>, %29, %cst_17 [2] : vector<2x8x8xf32> to vector<2x8xf32>
    %31 = vector.shape_cast %30 : vector<2x8xf32> to vector<2x8x1xf32>
    %32 = tpu.reciprocal %31 {approx = true} : vector<2x8x1xf32> -> vector<2x8x1xf32>
    %33 = vector.broadcast %32 : vector<2x8x1xf32> to vector<2x8x8xf32>
    %34 = arith.mulf %29, %33 : vector<2x8x8xf32>
    "tpu.trace_start"() <{level = 10 : i32, message = "bqk,bkd->bqd"}> : () -> ()
    %cst_18 = arith.constant dense<0.000000e+00> : vector<2x8x8xf32>
    %35 = tpu.matmul %34, %23, %cst_18 {dimension_numbers = #tpu.dot_dimension_numbers<[2], [1], [1], [2], [0, 0, 0, 1, 1, 2], [0], [0]>} : vector<2x8x8xf32>, vector<2x8x8xf32>, vector<2x8x8xf32> -> vector<2x8x8xf32>
    "tpu.trace_stop"() : () -> ()
    %c0_19 = arith.constant 0 : index
    %c0_20 = arith.constant 0 : index
    %c8 = arith.constant 8 : index
    %36 = vector.load %arg4[%c0_19, %c0_20, %c8] : memref<2x8x32xf32, #tpu.memory_space<vmem>>, vector<2x8x8xf32>
    tpu.vector_store %arg4[%c0_19, %c0_20, %c8], %35 {strides = array<i32>} : memref<2x8x32xf32, #tpu.memory_space<vmem>>, vector<2x8x8xf32>,
    %37 = vector.extract_strided_slice %2 {offsets = [0, 0, 16], sizes = [2, 8, 8], strides = [1, 1, 1]} : vector<2x8x32xf32> to vector<2x8x8xf32>
    %38 = vector.extract_strided_slice %3 {offsets = [0, 0, 16], sizes = [2, 8, 8], strides = [1, 1, 1]} : vector<2x8x32xf32> to vector<2x8x8xf32>
    %39 = vector.extract_strided_slice %4 {offsets = [0, 0, 16], sizes = [2, 8, 8], strides = [1, 1, 1]} : vector<2x8x32xf32> to vector<2x8x8xf32>
    "tpu.trace_start"() <{level = 10 : i32, message = "bqd,bkd->bqk"}> : () -> ()
    %cst_21 = arith.constant dense<0.000000e+00> : vector<2x8x8xf32>
    %40 = tpu.matmul %37, %38, %cst_21 {dimension_numbers = #tpu.dot_dimension_numbers<[2], [2], [1], [1], [0, 0, 0, 1, 1, 1], [0], [0]>} : vector<2x8x8xf32>, vector<2x8x8xf32>, vector<2x8x8xf32> -> vector<2x8x8xf32>
    "tpu.trace_stop"() : () -> ()
    %cst_22 = arith.constant dense<0xFF800000> : vector<2x8xf32>
    %41 = vector.multi_reduction <maximumf>, %40, %cst_22 [2] : vector<2x8x8xf32> to vector<2x8xf32>
    %42 = vector.shape_cast %41 : vector<2x8xf32> to vector<2x8x1xf32>
    %43 = vector.broadcast %42 : vector<2x8x1xf32> to vector<2x8x8xf32>
    %44 = arith.subf %40, %43 : vector<2x8x8xf32>
    %45 = math.exp %44 : vector<2x8x8xf32>
    %cst_23 = arith.constant dense<0.000000e+00> : vector<2x8xf32>
    %46 = vector.multi_reduction <add>, %45, %cst_23 [2] : vector<2x8x8xf32> to vector<2x8xf32>
    %47 = vector.shape_cast %46 : vector<2x8xf32> to vector<2x8x1xf32>
    %48 = tpu.reciprocal %47 {approx = true} : vector<2x8x1xf32> -> vector<2x8x1xf32>
    %49 = vector.broadcast %48 : vector<2x8x1xf32> to vector<2x8x8xf32>
    %50 = arith.mulf %45, %49 : vector<2x8x8xf32>
    "tpu.trace_start"() <{level = 10 : i32, message = "bqk,bkd->bqd"}> : () -> ()
    %cst_24 = arith.constant dense<0.000000e+00> : vector<2x8x8xf32>
    %51 = tpu.matmul %50, %39, %cst_24 {dimension_numbers = #tpu.dot_dimension_numbers<[2], [1], [1], [2], [0, 0, 0, 1, 1, 2], [0], [0]>} : vector<2x8x8xf32>, vector<2x8x8xf32>, vector<2x8x8xf32> -> vector<2x8x8xf32>
    "tpu.trace_stop"() : () -> ()
    %c0_25 = arith.constant 0 : index
    %c0_26 = arith.constant 0 : index
    %c16 = arith.constant 16 : index
    %52 = vector.load %arg4[%c0_25, %c0_26, %c16] : memref<2x8x32xf32, #tpu.memory_space<vmem>>, vector<2x8x8xf32>
    tpu.vector_store %arg4[%c0_25, %c0_26, %c16], %51 {strides = array<i32>} : memref<2x8x32xf32, #tpu.memory_space<vmem>>, vector<2x8x8xf32>,
    %53 = vector.extract_strided_slice %2 {offsets = [0, 0, 24], sizes = [2, 8, 8], strides = [1, 1, 1]} : vector<2x8x32xf32> to vector<2x8x8xf32>
    %54 = vector.extract_strided_slice %3 {offsets = [0, 0, 24], sizes = [2, 8, 8], strides = [1, 1, 1]} : vector<2x8x32xf32> to vector<2x8x8xf32>
    %55 = vector.extract_strided_slice %4 {offsets = [0, 0, 24], sizes = [2, 8, 8], strides = [1, 1, 1]} : vector<2x8x32xf32> to vector<2x8x8xf32>
    "tpu.trace_start"() <{level = 10 : i32, message = "bqd,bkd->bqk"}> : () -> ()
    %cst_27 = arith.constant dense<0.000000e+00> : vector<2x8x8xf32>
    %56 = tpu.matmul %53, %54, %cst_27 {dimension_numbers = #tpu.dot_dimension_numbers<[2], [2], [1], [1], [0, 0, 0, 1, 1, 1], [0], [0]>} : vector<2x8x8xf32>, vector<2x8x8xf32>, vector<2x8x8xf32> -> vector<2x8x8xf32>
    "tpu.trace_stop"() : () -> ()
    %cst_28 = arith.constant dense<0xFF800000> : vector<2x8xf32>
    %57 = vector.multi_reduction <maximumf>, %56, %cst_28 [2] : vector<2x8x8xf32> to vector<2x8xf32>
    %58 = vector.shape_cast %57 : vector<2x8xf32> to vector<2x8x1xf32>
    %59 = vector.broadcast %58 : vector<2x8x1xf32> to vector<2x8x8xf32>
    %60 = arith.subf %56, %59 : vector<2x8x8xf32>
    %61 = math.exp %60 : vector<2x8x8xf32>
    %cst_29 = arith.constant dense<0.000000e+00> : vector<2x8xf32>
    %62 = vector.multi_reduction <add>, %61, %cst_29 [2] : vector<2x8x8xf32> to vector<2x8xf32>
    %63 = vector.shape_cast %62 : vector<2x8xf32> to vector<2x8x1xf32>
    %64 = tpu.reciprocal %63 {approx = true} : vector<2x8x1xf32> -> vector<2x8x1xf32>
    %65 = vector.broadcast %64 : vector<2x8x1xf32> to vector<2x8x8xf32>
    %66 = arith.mulf %61, %65 : vector<2x8x8xf32>
    "tpu.trace_start"() <{level = 10 : i32, message = "bqk,bkd->bqd"}> : () -> ()
    %cst_30 = arith.constant dense<0.000000e+00> : vector<2x8x8xf32>
    %67 = tpu.matmul %66, %55, %cst_30 {dimension_numbers = #tpu.dot_dimension_numbers<[2], [1], [1], [2], [0, 0, 0, 1, 1, 2], [0], [0]>} : vector<2x8x8xf32>, vector<2x8x8xf32>, vector<2x8x8xf32> -> vector<2x8x8xf32>
    "tpu.trace_stop"() : () -> ()
    %c0_31 = arith.constant 0 : index
    %c0_32 = arith.constant 0 : index
    %c24 = arith.constant 24 : index
    %68 = vector.load %arg4[%c0_31, %c0_32, %c24] : memref<2x8x32xf32, #tpu.memory_space<vmem>>, vector<2x8x8xf32>
    tpu.vector_store %arg4[%c0_31, %c0_32, %c24], %67 {strides = array<i32>} : memref<2x8x32xf32, #tpu.memory_space<vmem>>, vector<2x8x8xf32>,
    return
  }
  func.func @transform_0(%arg0: i32) -> (i32, i32, i32) {
    %c0_i32 = arith.constant 0 : i32
    %c0_i32_0 = arith.constant 0 : i32
    %c0_i32_1 = arith.constant 0 : i32
    return %arg0, %c0_i32, %c0_i32_0 : i32, i32, i32
  }
  func.func @transform_1(%arg0: i32) -> (i32, i32, i32) {
    %c0_i32 = arith.constant 0 : i32
    %c0_i32_0 = arith.constant 0 : i32
    %c0_i32_1 = arith.constant 0 : i32
    return %arg0, %c0_i32, %c0_i32_0 : i32, i32, i32
  }
  func.func @transform_2(%arg0: i32) -> (i32, i32, i32) {
    %c0_i32 = arith.constant 0 : i32
    %c0_i32_0 = arith.constant 0 : i32
    %c0_i32_1 = arith.constant 0 : i32
    return %arg0, %c0_i32, %c0_i32_0 : i32, i32, i32
  }
  func.func @transform_3(%arg0: i32) -> (i32, i32, i32) {
    %c0_i32 = arith.constant 0 : i32
    %c0_i32_0 = arith.constant 0 : i32
    %c0_i32_1 = arith.constant 0 : i32
    return %arg0, %c0_i32, %c0_i32_0 : i32, i32, i32
  }
}

</mosaic_0001>

<llo_original>
// kernel: tpu_custom_call.1
$region0: #{tpu_custom_call.1}
  #allocation0 [shape = 'u32[]', space=smem, size = 0x4, offset = 0x4, fixed_abs, tag = 'smem constant byte address 0x4 - core index']
  #allocation1 [shape = 'u32[72,128]{1,0:T(1,128)}', space=vmem, size = 0x9000, scoped, tag = 'internal scratch']
  %s0 = inlined_call_operand.hbm [shape: f32[2,8,32], index: 0, kind: input, shape index: {}]
  %s1 = inlined_call_operand.hbm [shape: f32[2,8,32], index: 1, kind: input, shape index: {}]
  %s2 = inlined_call_operand.hbm [shape: f32[2,8,32], index: 2, kind: input, shape index: {}]
  %s3 = inlined_call_operand.hbm [shape: f32[2,8,32], index: 3, kind: output, shape index: {}]
  %s4 = sld [smem:[#allocation0]]
  $region34: #{tpu_custom_call.1} parent=0
    _
  %s6 = ssub.s32 1, %s4
  %s7 = scalar_select 0, %s6, %s4
  $region1: #{tpu_custom_call.1} parent=0
    #allocation2 [shape = 'u8[8192]{0}', space=vmem, size = 0x2000, scoped, tag = 'input window, operand 0, single buffered']
    #allocation3 [shape = 's32[1]{0}', space=sflag, size = 0x4, scoped, tag = 'scoped memory for tpu_custom_call.1']
    #allocation4 [shape = 's32[1]{0}', space=sflag, size = 0x4, scoped, tag = 'scoped memory for tpu_custom_call.1']
    #allocation5 [shape = 'u8[8192]{0}', space=vmem, size = 0x2000, scoped, tag = 'input window, operand 1, single buffered']
    #allocation6 [shape = 's32[1]{0}', space=sflag, size = 0x4, scoped, tag = 'scoped memory for tpu_custom_call.1']
    #allocation7 [shape = 'u8[8192]{0}', space=vmem, size = 0x2000, scoped, tag = 'input window, operand 2, single buffered']
    #allocation8 [shape = 'u8[8192]{0}', space=vmem, size = 0x2000, scoped, tag = 'output window, operand 0, single buffered']
    %8 = vsyncpa [#allocation3], 0
    %9 = vsyncpa [#allocation6], 0
    %10 = vsyncpa [#allocation4], 0
    // Predicated region
    $region2: #{tpu_custom_call.1} parent=1 // pred_check
      _
    $region3: #{tpu_custom_call.1} parent=1 // pred_check_branch
      %12 = sbr.rel (0) target = $region5
    $region4: #{tpu_custom_call.1} parent=1 // pred_region
      %14 = vsyncadd [#allocation3], 0
      %s15 = sshll.u32 %s0, 4
      %s16 = int_to_ptr.hbm [resolvable:$true] %s15
      %s17 = sshll.u32 [#allocation2], 4
      %s18 = int_to_ptr.vmem [resolvable:$true] %s17
      %23 = dma.hbm_to_vmem [thread:$0]  %s16, 256, %s18, [#allocation3], 128, 128, 8
    $region5: #{tpu_custom_call.1} parent=1 // pred_fallthru
      _
    // Predicated region
    $region6: #{tpu_custom_call.1} parent=1 // pred_check
      _
    $region7: #{tpu_custom_call.1} parent=1 // pred_check_branch
      %25 = sbr.rel (0) target = $region9
    $region8: #{tpu_custom_call.1} parent=1 // pred_region
      %27 = vsyncadd [#allocation6], 0
      %s28 = sshll.u32 %s1, 4
      %s29 = int_to_ptr.hbm [resolvable:$true] %s28
      %s30 = sshll.u32 [#allocation5], 4
      %s31 = int_to_ptr.vmem [resolvable:$true] %s30
      %36 = dma.hbm_to_vmem [thread:$0]  %s29, 256, %s31, [#allocation6], 128, 128, 8
    $region9: #{tpu_custom_call.1} parent=1 // pred_fallthru
      _
    // Predicated region
    $region10: #{tpu_custom_call.1} parent=1 // pred_check
      _
    $region11: #{tpu_custom_call.1} parent=1 // pred_check_branch
      %38 = sbr.rel (0) target = $region13
    $region12: #{tpu_custom_call.1} parent=1 // pred_region
      %40 = vsyncadd [#allocation6], 0
      %s41 = sshll.u32 %s2, 4
      %s42 = int_to_ptr.hbm [resolvable:$true] %s41
      %s43 = sshll.u32 [#allocation7], 4
      %s44 = int_to_ptr.vmem [resolvable:$true] %s43
      %49 = dma.hbm_to_vmem [thread:$0]  %s42, 256, %s44, [#allocation6], 128, 128, 8
    $region13: #{tpu_custom_call.1} parent=1 // pred_fallthru
      _
    // Predicated region
    $region14: #{tpu_custom_call.1} parent=1 // pred_check
      _
    $region15: #{tpu_custom_call.1} parent=1 // pred_check_branch
      %51 = sbr.rel (0) target = $region17
    $region16: #{tpu_custom_call.1} parent=1 // pred_region
      %53 = dma.done [#allocation3], 256
    $region17: #{tpu_custom_call.1} parent=1 // pred_fallthru
      _
    // Predicated region
    $region18: #{tpu_custom_call.1} parent=1 // pred_check
      _
    $region19: #{tpu_custom_call.1} parent=1 // pred_check_branch
      %55 = sbr.rel (0) target = $region21
    $region20: #{tpu_custom_call.1} parent=1 // pred_region
      %57 = dma.done [#allocation6], 256
    $region21: #{tpu_custom_call.1} parent=1 // pred_fallthru
      _
    // Predicated region
    $region22: #{tpu_custom_call.1} parent=1 // pred_check
      _
    $region23: #{tpu_custom_call.1} parent=1 // pred_check_branch
      %59 = sbr.rel (0) target = $region25
    $region24: #{tpu_custom_call.1} parent=1 // pred_region
      %61 = dma.done [#allocation6], 256
    $region25: #{tpu_custom_call.1} parent=1 // pred_fallthru
      _
    %v62 = vld [vmem:[#allocation2] sm:$0xff]
    %v63 = vld [vmem:[#allocation2 + $0x8] sm:$0xff]
    %v64 = vmul.f32 %v62, 0.35355338
    %v65 = vmul.f32 %v63, 0.35355338
    %v66 = vld [vmem:[#allocation5] sm:$0xff]
    %v67 = vld [vmem:[#allocation5 + $0x8] sm:$0xff]
    %v68 = vld [vmem:[#allocation7] sm:$0xff]
    %v69 = vld [vmem:[#allocation7 + $0x8] sm:$0xff]
    %vm70 = vcmask 64512
    %v72 = vsel %vm70, %v64, 0
    %v75 = vsel %vm70, %v66, 0
    %77 = vmatpush.xpose.msra.mxu0 0.0
    %78 = vmatpush.xpose.msra.mxu0 0.0
    %79 = vmatpush.xpose.msra.mxu0 0.0
    %80 = vmatpush.xpose.msra.mxu0 0.0
    %81 = vmatpush.xpose.msra.mxu0 0.0
    %82 = vmatpush.xpose.msra.mxu0 0.0
    %83 = vmatpush.xpose.msra.mxu0 0.0
    %84 = vmatpush.xpose.msra.mxu0 0.0
    %85 = vmatpush.xpose.msra.mxu0 0.0
    %86 = vmatpush.xpose.msra.mxu0 0.0
    %87 = vmatpush.xpose.msra.mxu0 0.0
    %88 = vmatpush.xpose.msra.mxu0 0.0
    %89 = vmatpush.xpose.msra.mxu0 0.0
    %90 = vmatpush.xpose.msra.mxu0 0.0
    %91 = vmatpush.xpose.msra.mxu0 0.0
    %92 = vmatpush.xpose.msra.mxu0 %v75
    %93 = vmatmul.f32.gmra.mxu0 %v72
    %v94 = vpop.f32.mrf.mxu0
    %v95 = vadd.f32 0.0, %v94
    %96 = vdwg.mxu0
    %v98 = vsel %vm70, %v65, 0
    %v101 = vsel %vm70, %v67, 0
    %103 = vmatpush.xpose.msra.mxu0 0.0
    %104 = vmatpush.xpose.msra.mxu0 0.0
    %105 = vmatpush.xpose.msra.mxu0 0.0
    %106 = vmatpush.xpose.msra.mxu0 0.0
    %107 = vmatpush.xpose.msra.mxu0 0.0
    %108 = vmatpush.xpose.msra.mxu0 0.0
    %109 = vmatpush.xpose.msra.mxu0 0.0
    %110 = vmatpush.xpose.msra.mxu0 0.0
    %111 = vmatpush.xpose.msra.mxu0 0.0
    %112 = vmatpush.xpose.msra.mxu0 0.0
    %113 = vmatpush.xpose.msra.mxu0 0.0
    %114 = vmatpush.xpose.msra.mxu0 0.0
    %115 = vmatpush.xpose.msra.mxu0 0.0
    %116 = vmatpush.xpose.msra.mxu0 0.0
    %117 = vmatpush.xpose.msra.mxu0 0.0
    %118 = vmatpush.xpose.msra.mxu0 %v101
    %119 = vmatmul.f32.gmra.mxu0 %v98
    %v120 = vpop.f32.mrf.mxu0
    %v121 = vadd.f32 0.0, %v120
    %122 = vdwg.mxu0
    %v123 = vsel %vm70, %v95, -inf
    %124 = vmax.xlane.f32.xlu0 %v123
    %v125 = vpop.xlane.xlu0 %124
    %v126 = vsel %vm70, %v121, -inf
    %127 = vmax.xlane.f32.xlu0 %v126
    %v128 = vpop.xlane.xlu0 %127
    %v129 = vsub.f32 %v95, %v125
    %v130 = vsub.f32 %v121, %v128
    %v131 = vmul.f32 %v129, 1.442695
    %v132 = vpow.pop %v131
    %v133 = vmul.f32 %v130, 1.442695
    %v134 = vpow.pop %v133
    %v135 = vsel %vm70, %v132, 0.0
    %136 = vadd.xlane.f32.xlu0 %v135
    %v137 = vpop.xlane.xlu0 %136
    %v138 = vsel %vm70, %v134, 0.0
    %139 = vadd.xlane.f32.xlu0 %v138
    %v140 = vpop.xlane.xlu0 %139
    %v141 = vrcp.pop %v137
    %v142 = vrcp.pop %v140
    %v143 = vmul.f32 %v132, %v141
    %v144 = vmul.f32 %v134, %v142
    %v146 = vsel %vm70, %v143, 0
    %148 = vmatpush.msra.mxu0 0.0
    %149 = vmatpush.msra.mxu0 0.0
    %150 = vmatpush.msra.mxu0 0.0
    %151 = vmatpush.msra.mxu0 0.0
    %152 = vmatpush.msra.mxu0 0.0
    %153 = vmatpush.msra.mxu0 0.0
    %154 = vmatpush.msra.mxu0 0.0
    %155 = vmatpush.msra.mxu0 0.0
    %156 = vmatpush.msra.mxu0 0.0
    %157 = vmatpush.msra.mxu0 0.0
    %158 = vmatpush.msra.mxu0 0.0
    %159 = vmatpush.msra.mxu0 0.0
    %160 = vmatpush.msra.mxu0 0.0
    %161 = vmatpush.msra.mxu0 0.0
    %162 = vmatpush.msra.mxu0 0.0
    %163 = vmatpush.msra.mxu0 %v68
    %164 = vmatmul.f32.gmra.mxu0 %v146
    %v165 = vpop.f32.mrf.mxu0
    %v166 = vadd.f32 0.0, %v165
    %167 = vdwg.mxu0
    %v169 = vsel %vm70, %v144, 0
    %171 = vmatpush.msra.mxu0 0.0
    %172 = vmatpush.msra.mxu0 0.0
    %173 = vmatpush.msra.mxu0 0.0
    %174 = vmatpush.msra.mxu0 0.0
    %175 = vmatpush.msra.mxu0 0.0
    %176 = vmatpush.msra.mxu0 0.0
    %177 = vmatpush.msra.mxu0 0.0
    %178 = vmatpush.msra.mxu0 0.0
    %179 = vmatpush.msra.mxu0 0.0
    %180 = vmatpush.msra.mxu0 0.0
    %181 = vmatpush.msra.mxu0 0.0
    %182 = vmatpush.msra.mxu0 0.0
    %183 = vmatpush.msra.mxu0 0.0
    %184 = vmatpush.msra.mxu0 0.0
    %185 = vmatpush.msra.mxu0 0.0
    %186 = vmatpush.msra.mxu0 %v69
    %187 = vmatmul.f32.gmra.mxu0 %v169
    %v188 = vpop.f32.mrf.mxu0
    %v189 = vadd.f32 0.0, %v188
    %190 = vdwg.mxu0
    %191 = vst.msk [vmem:[#allocation8] sm:$0xff] %vm70, %v166
    %192 = vst.msk [vmem:[#allocation8 + $0x8] sm:$0xff] %vm70, %v189
    %193 = vrot.lane.b32.xlu0 %v64, 120
    %v194 = vpop.permute.xlu0 %193
    %195 = vrot.lane.b32.xlu0 %v66, 120
    %v196 = vpop.permute.xlu0 %195
    %v197 = vsel %vm70, %v194, 0
    %v199 = vsel %vm70, %v196, 0
    %201 = vmatpush.xpose.msra.mxu0 0.0
    %202 = vmatpush.xpose.msra.mxu0 0.0
    %203 = vmatpush.xpose.msra.mxu0 0.0
    %204 = vmatpush.xpose.msra.mxu0 0.0
    %205 = vmatpush.xpose.msra.mxu0 0.0
    %206 = vmatpush.xpose.msra.mxu0 0.0
    %207 = vmatpush.xpose.msra.mxu0 0.0
    %208 = vmatpush.xpose.msra.mxu0 0.0
    %209 = vmatpush.xpose.msra.mxu0 0.0
    %210 = vmatpush.xpose.msra.mxu0 0.0
    %211 = vmatpush.xpose.msra.mxu0 0.0
    %212 = vmatpush.xpose.msra.mxu0 0.0
    %213 = vmatpush.xpose.msra.mxu0 0.0
    %214 = vmatpush.xpose.msra.mxu0 0.0
    %215 = vmatpush.xpose.msra.mxu0 0.0
    %216 = vmatpush.xpose.msra.mxu0 %v199
    %217 = vmatmul.f32.gmra.mxu0 %v197
    %v218 = vpop.f32.mrf.mxu0
    %v219 = vadd.f32 0.0, %v218
    %220 = vdwg.mxu0
    %221 = vrot.lane.b32.xlu0 %v65, 120
    %v222 = vpop.permute.xlu0 %221
    %223 = vrot.lane.b32.xlu0 %v67, 120
    %v224 = vpop.permute.xlu0 %223
    %v225 = vsel %vm70, %v222, 0
    %v227 = vsel %vm70, %v224, 0
    %229 = vmatpush.xpose.msra.mxu0 0.0
    %230 = vmatpush.xpose.msra.mxu0 0.0
    %231 = vmatpush.xpose.msra.mxu0 0.0
    %232 = vmatpush.xpose.msra.mxu0 0.0
    %233 = vmatpush.xpose.msra.mxu0 0.0
    %234 = vmatpush.xpose.msra.mxu0 0.0
    %235 = vmatpush.xpose.msra.mxu0 0.0
    %236 = vmatpush.xpose.msra.mxu0 0.0
    %237 = vmatpush.xpose.msra.mxu0 0.0
    %238 = vmatpush.xpose.msra.mxu0 0.0
    %239 = vmatpush.xpose.msra.mxu0 0.0
    %240 = vmatpush.xpose.msra.mxu0 0.0
    %241 = vmatpush.xpose.msra.mxu0 0.0
    %242 = vmatpush.xpose.msra.mxu0 0.0
    %243 = vmatpush.xpose.msra.mxu0 0.0
    %244 = vmatpush.xpose.msra.mxu0 %v227
    %245 = vmatmul.f32.gmra.mxu0 %v225
    %v246 = vpop.f32.mrf.mxu0
    %v247 = vadd.f32 0.0, %v246
    %248 = vdwg.mxu0
    %v249 = vsel %vm70, %v219, -inf
    %250 = vmax.xlane.f32.xlu0 %v249
    %v251 = vpop.xlane.xlu0 %250
    %v252 = vsel %vm70, %v247, -inf
    %253 = vmax.xlane.f32.xlu0 %v252
    %v254 = vpop.xlane.xlu0 %253
    %v255 = vsub.f32 %v219, %v251
    %v256 = vsub.f32 %v247, %v254
    %v257 = vmul.f32 %v255, 1.442695
    %v258 = vpow.pop %v257
    %v259 = vmul.f32 %v256, 1.442695
    %v260 = vpow.pop %v259
    %v261 = vsel %vm70, %v258, 0.0
    %262 = vadd.xlane.f32.xlu0 %v261
    %v263 = vpop.xlane.xlu0 %262
    %v264 = vsel %vm70, %v260, 0.0
    %265 = vadd.xlane.f32.xlu0 %v264
    %v266 = vpop.xlane.xlu0 %265
    %v267 = vrcp.pop %v263
    %v268 = vrcp.pop %v266
    %v269 = vmul.f32 %v258, %v267
    %v270 = vmul.f32 %v260, %v268
    %272 = vrot.lane.b32.xlu0 %v68, 120
    %v273 = vpop.permute.xlu0 %272
    %v276 = vsel %vm70, %v269, 0
    %278 = vmatpush.msra.mxu0 0.0
    %279 = vmatpush.msra.mxu0 0.0
    %280 = vmatpush.msra.mxu0 0.0
    %281 = vmatpush.msra.mxu0 0.0
    %282 = vmatpush.msra.mxu0 0.0
    %283 = vmatpush.msra.mxu0 0.0
    %284 = vmatpush.msra.mxu0 0.0
    %285 = vmatpush.msra.mxu0 0.0
    %286 = vmatpush.msra.mxu0 0.0
    %287 = vmatpush.msra.mxu0 0.0
    %288 = vmatpush.msra.mxu0 0.0
    %289 = vmatpush.msra.mxu0 0.0
    %290 = vmatpush.msra.mxu0 0.0
    %291 = vmatpush.msra.mxu0 0.0
    %292 = vmatpush.msra.mxu0 0.0
    %293 = vmatpush.msra.mxu0 %v273
    %294 = vmatmul.f32.gmra.mxu0 %v276
    %v295 = vpop.f32.mrf.mxu0
    %v296 = vadd.f32 0.0, %v295
    %297 = vdwg.mxu0
    %299 = vrot.lane.b32.xlu0 %v69, 120
    %v300 = vpop.permute.xlu0 %299
    %v303 = vsel %vm70, %v270, 0
    %305 = vmatpush.msra.mxu0 0.0
    %306 = vmatpush.msra.mxu0 0.0
    %307 = vmatpush.msra.mxu0 0.0
    %308 = vmatpush.msra.mxu0 0.0
    %309 = vmatpush.msra.mxu0 0.0
    %310 = vmatpush.msra.mxu0 0.0
    %311 = vmatpush.msra.mxu0 0.0
    %312 = vmatpush.msra.mxu0 0.0
    %313 = vmatpush.msra.mxu0 0.0
    %314 = vmatpush.msra.mxu0 0.0
    %315 = vmatpush.msra.mxu0 0.0
    %316 = vmatpush.msra.mxu0 0.0
    %317 = vmatpush.msra.mxu0 0.0
    %318 = vmatpush.msra.mxu0 0.0
    %319 = vmatpush.msra.mxu0 0.0
    %320 = vmatpush.msra.mxu0 %v300
    %321 = vmatmul.f32.gmra.mxu0 %v303
    %v322 = vpop.f32.mrf.mxu0
    %v323 = vadd.f32 0.0, %v322
    %324 = vdwg.mxu0
    %327 = vrot.lane.b32.xlu0 %v296, 8
    %v328 = vpop.permute.xlu0 %327
    %329 = vrot.lane.b32.xlu0 %v323, 8
    %v330 = vpop.permute.xlu0 %329
    %vm333 = vcmask 130112
    %334 = vst.msk [vmem:[#allocation8] sm:$0xff] %vm333, %v328
    %335 = vst.msk [vmem:[#allocation8 + $0x8] sm:$0xff] %vm333, %v330
    %336 = vrot.lane.b32.xlu0 %v64, 112
    %v337 = vpop.permute.xlu0 %336
    %338 = vrot.lane.b32.xlu0 %v66, 112
    %v339 = vpop.permute.xlu0 %338
    %v340 = vsel %vm70, %v337, 0
    %v342 = vsel %vm70, %v339, 0
    %344 = vmatpush.xpose.msra.mxu0 0.0
    %345 = vmatpush.xpose.msra.mxu0 0.0
    %346 = vmatpush.xpose.msra.mxu0 0.0
    %347 = vmatpush.xpose.msra.mxu0 0.0
    %348 = vmatpush.xpose.msra.mxu0 0.0
    %349 = vmatpush.xpose.msra.mxu0 0.0
    %350 = vmatpush.xpose.msra.mxu0 0.0
    %351 = vmatpush.xpose.msra.mxu0 0.0
    %352 = vmatpush.xpose.msra.mxu0 0.0
    %353 = vmatpush.xpose.msra.mxu0 0.0
    %354 = vmatpush.xpose.msra.mxu0 0.0
    %355 = vmatpush.xpose.msra.mxu0 0.0
    %356 = vmatpush.xpose.msra.mxu0 0.0
    %357 = vmatpush.xpose.msra.mxu0 0.0
    %358 = vmatpush.xpose.msra.mxu0 0.0
    %359 = vmatpush.xpose.msra.mxu0 %v342
    %360 = vmatmul.f32.gmra.mxu0 %v340
    %v361 = vpop.f32.mrf.mxu0
    %v362 = vadd.f32 0.0, %v361
    %363 = vdwg.mxu0
    %364 = vrot.lane.b32.xlu0 %v65, 112
    %v365 = vpop.permute.xlu0 %364
    %366 = vrot.lane.b32.xlu0 %v67, 112
    %v367 = vpop.permute.xlu0 %366
    %v368 = vsel %vm70, %v365, 0
    %v370 = vsel %vm70, %v367, 0
    %372 = vmatpush.xpose.msra.mxu0 0.0
    %373 = vmatpush.xpose.msra.mxu0 0.0
    %374 = vmatpush.xpose.msra.mxu0 0.0
    %375 = vmatpush.xpose.msra.mxu0 0.0
    %376 = vmatpush.xpose.msra.mxu0 0.0
    %377 = vmatpush.xpose.msra.mxu0 0.0
    %378 = vmatpush.xpose.msra.mxu0 0.0
    %379 = vmatpush.xpose.msra.mxu0 0.0
    %380 = vmatpush.xpose.msra.mxu0 0.0
    %381 = vmatpush.xpose.msra.mxu0 0.0
    %382 = vmatpush.xpose.msra.mxu0 0.0
    %383 = vmatpush.xpose.msra.mxu0 0.0
    %384 = vmatpush.xpose.msra.mxu0 0.0
    %385 = vmatpush.xpose.msra.mxu0 0.0
    %386 = vmatpush.xpose.msra.mxu0 0.0
    %387 = vmatpush.xpose.msra.mxu0 %v370
    %388 = vmatmul.f32.gmra.mxu0 %v368
    %v389 = vpop.f32.mrf.mxu0
    %v390 = vadd.f32 0.0, %v389
    %391 = vdwg.mxu0
    %v392 = vsel %vm70, %v362, -inf
    %393 = vmax.xlane.f32.xlu0 %v392
    %v394 = vpop.xlane.xlu0 %393
    %v395 = vsel %vm70, %v390, -inf
    %396 = vmax.xlane.f32.xlu0 %v395
    %v397 = vpop.xlane.xlu0 %396
    %v398 = vsub.f32 %v362, %v394
    %v399 = vsub.f32 %v390, %v397
    %v400 = vmul.f32 %v398, 1.442695
    %v401 = vpow.pop %v400
    %v402 = vmul.f32 %v399, 1.442695
    %v403 = vpow.pop %v402
    %v404 = vsel %vm70, %v401, 0.0
    %405 = vadd.xlane.f32.xlu0 %v404
    %v406 = vpop.xlane.xlu0 %405
    %v407 = vsel %vm70, %v403, 0.0
    %408 = vadd.xlane.f32.xlu0 %v407
    %v409 = vpop.xlane.xlu0 %408
    %v410 = vrcp.pop %v406
    %v411 = vrcp.pop %v409
    %v412 = vmul.f32 %v401, %v410
    %v413 = vmul.f32 %v403, %v411
    %414 = vrot.lane.b32.xlu0 %v68, 112
    %v415 = vpop.permute.xlu0 %414
    %v418 = vsel %vm70, %v412, 0
    %420 = vmatpush.msra.mxu0 0.0
    %421 = vmatpush.msra.mxu0 0.0
    %422 = vmatpush.msra.mxu0 0.0
    %423 = vmatpush.msra.mxu0 0.0
    %424 = vmatpush.msra.mxu0 0.0
    %425 = vmatpush.msra.mxu0 0.0
    %426 = vmatpush.msra.mxu0 0.0
    %427 = vmatpush.msra.mxu0 0.0
    %428 = vmatpush.msra.mxu0 0.0
    %429 = vmatpush.msra.mxu0 0.0
    %430 = vmatpush.msra.mxu0 0.0
    %431 = vmatpush.msra.mxu0 0.0
    %432 = vmatpush.msra.mxu0 0.0
    %433 = vmatpush.msra.mxu0 0.0
    %434 = vmatpush.msra.mxu0 0.0
    %435 = vmatpush.msra.mxu0 %v415
    %436 = vmatmul.f32.gmra.mxu0 %v418
    %v437 = vpop.f32.mrf.mxu0
    %v438 = vadd.f32 0.0, %v437
    %439 = vdwg.mxu0
    %440 = vrot.lane.b32.xlu0 %v69, 112
    %v441 = vpop.permute.xlu0 %440
    %v444 = vsel %vm70, %v413, 0
    %446 = vmatpush.msra.mxu0 0.0
    %447 = vmatpush.msra.mxu0 0.0
    %448 = vmatpush.msra.mxu0 0.0
    %449 = vmatpush.msra.mxu0 0.0
    %450 = vmatpush.msra.mxu0 0.0
    %451 = vmatpush.msra.mxu0 0.0
    %452 = vmatpush.msra.mxu0 0.0
    %453 = vmatpush.msra.mxu0 0.0
    %454 = vmatpush.msra.mxu0 0.0
    %455 = vmatpush.msra.mxu0 0.0
    %456 = vmatpush.msra.mxu0 0.0
    %457 = vmatpush.msra.mxu0 0.0
    %458 = vmatpush.msra.mxu0 0.0
    %459 = vmatpush.msra.mxu0 0.0
    %460 = vmatpush.msra.mxu0 0.0
    %461 = vmatpush.msra.mxu0 %v441
    %462 = vmatmul.f32.gmra.mxu0 %v444
    %v463 = vpop.f32.mrf.mxu0
    %v464 = vadd.f32 0.0, %v463
    %465 = vdwg.mxu0
    %468 = vrot.lane.b32.xlu0 %v438, 16
    %v469 = vpop.permute.xlu0 %468
    %470 = vrot.lane.b32.xlu0 %v464, 16
    %v471 = vpop.permute.xlu0 %470
    %vm474 = vcmask 195712
    %475 = vst.msk [vmem:[#allocation8] sm:$0xff] %vm474, %v469
    %476 = vst.msk [vmem:[#allocation8 + $0x8] sm:$0xff] %vm474, %v471
    %477 = vrot.lane.b32.xlu0 %v64, 104
    %v478 = vpop.permute.xlu0 %477
    %479 = vrot.lane.b32.xlu0 %v66, 104
    %v480 = vpop.permute.xlu0 %479
    %v481 = vsel %vm70, %v478, 0
    %v483 = vsel %vm70, %v480, 0
    %485 = vmatpush.xpose.msra.mxu0 0.0
    %486 = vmatpush.xpose.msra.mxu0 0.0
    %487 = vmatpush.xpose.msra.mxu0 0.0
    %488 = vmatpush.xpose.msra.mxu0 0.0
    %489 = vmatpush.xpose.msra.mxu0 0.0
    %490 = vmatpush.xpose.msra.mxu0 0.0
    %491 = vmatpush.xpose.msra.mxu0 0.0
    %492 = vmatpush.xpose.msra.mxu0 0.0
    %493 = vmatpush.xpose.msra.mxu0 0.0
    %494 = vmatpush.xpose.msra.mxu0 0.0
    %495 = vmatpush.xpose.msra.mxu0 0.0
    %496 = vmatpush.xpose.msra.mxu0 0.0
    %497 = vmatpush.xpose.msra.mxu0 0.0
    %498 = vmatpush.xpose.msra.mxu0 0.0
    %499 = vmatpush.xpose.msra.mxu0 0.0
    %500 = vmatpush.xpose.msra.mxu0 %v483
    %501 = vmatmul.f32.gmra.mxu0 %v481
    %v502 = vpop.f32.mrf.mxu0
    %v503 = vadd.f32 0.0, %v502
    %504 = vdwg.mxu0
    %505 = vrot.lane.b32.xlu0 %v65, 104
    %v506 = vpop.permute.xlu0 %505
    %507 = vrot.lane.b32.xlu0 %v67, 104
    %v508 = vpop.permute.xlu0 %507
    %v509 = vsel %vm70, %v506, 0
    %v511 = vsel %vm70, %v508, 0
    %513 = vmatpush.xpose.msra.mxu0 0.0
    %514 = vmatpush.xpose.msra.mxu0 0.0
    %515 = vmatpush.xpose.msra.mxu0 0.0
    %516 = vmatpush.xpose.msra.mxu0 0.0
    %517 = vmatpush.xpose.msra.mxu0 0.0
    %518 = vmatpush.xpose.msra.mxu0 0.0
    %519 = vmatpush.xpose.msra.mxu0 0.0
    %520 = vmatpush.xpose.msra.mxu0 0.0
    %521 = vmatpush.xpose.msra.mxu0 0.0
    %522 = vmatpush.xpose.msra.mxu0 0.0
    %523 = vmatpush.xpose.msra.mxu0 0.0
    %524 = vmatpush.xpose.msra.mxu0 0.0
    %525 = vmatpush.xpose.msra.mxu0 0.0
    %526 = vmatpush.xpose.msra.mxu0 0.0
    %527 = vmatpush.xpose.msra.mxu0 0.0
    %528 = vmatpush.xpose.msra.mxu0 %v511
    %529 = vmatmul.f32.gmra.mxu0 %v509
    %v530 = vpop.f32.mrf.mxu0
    %v531 = vadd.f32 0.0, %v530
    %532 = vdwg.mxu0
    %v533 = vsel %vm70, %v503, -inf
    %534 = vmax.xlane.f32.xlu0 %v533
    %v535 = vpop.xlane.xlu0 %534
    %v536 = vsel %vm70, %v531, -inf
    %537 = vmax.xlane.f32.xlu0 %v536
    %v538 = vpop.xlane.xlu0 %537
    %v539 = vsub.f32 %v503, %v535
    %v540 = vsub.f32 %v531, %v538
    %v541 = vmul.f32 %v539, 1.442695
    %v542 = vpow.pop %v541
    %v543 = vmul.f32 %v540, 1.442695
    %v544 = vpow.pop %v543
    %v545 = vsel %vm70, %v542, 0.0
    %546 = vadd.xlane.f32.xlu0 %v545
    %v547 = vpop.xlane.xlu0 %546
    %v548 = vsel %vm70, %v544, 0.0
    %549 = vadd.xlane.f32.xlu0 %v548
    %v550 = vpop.xlane.xlu0 %549
    %v551 = vrcp.pop %v547
    %v552 = vrcp.pop %v550
    %v553 = vmul.f32 %v542, %v551
    %v554 = vmul.f32 %v544, %v552
    %555 = vrot.lane.b32.xlu0 %v68, 104
    %v556 = vpop.permute.xlu0 %555
    %v559 = vsel %vm70, %v553, 0
    %561 = vmatpush.msra.mxu0 0.0
    %562 = vmatpush.msra.mxu0 0.0
    %563 = vmatpush.msra.mxu0 0.0
    %564 = vmatpush.msra.mxu0 0.0
    %565 = vmatpush.msra.mxu0 0.0
    %566 = vmatpush.msra.mxu0 0.0
    %567 = vmatpush.msra.mxu0 0.0
    %568 = vmatpush.msra.mxu0 0.0
    %569 = vmatpush.msra.mxu0 0.0
    %570 = vmatpush.msra.mxu0 0.0
    %571 = vmatpush.msra.mxu0 0.0
    %572 = vmatpush.msra.mxu0 0.0
    %573 = vmatpush.msra.mxu0 0.0
    %574 = vmatpush.msra.mxu0 0.0
    %575 = vmatpush.msra.mxu0 0.0
    %576 = vmatpush.msra.mxu0 %v556
    %577 = vmatmul.f32.gmra.mxu0 %v559
    %v578 = vpop.f32.mrf.mxu0
    %v579 = vadd.f32 0.0, %v578
    %580 = vdwg.mxu0
    %581 = vrot.lane.b32.xlu0 %v69, 104
    %v582 = vpop.permute.xlu0 %581
    %v585 = vsel %vm70, %v554, 0
    %587 = vmatpush.msra.mxu0 0.0
    %588 = vmatpush.msra.mxu0 0.0
    %589 = vmatpush.msra.mxu0 0.0
    %590 = vmatpush.msra.mxu0 0.0
    %591 = vmatpush.msra.mxu0 0.0
    %592 = vmatpush.msra.mxu0 0.0
    %593 = vmatpush.msra.mxu0 0.0
    %594 = vmatpush.msra.mxu0 0.0
    %595 = vmatpush.msra.mxu0 0.0
    %596 = vmatpush.msra.mxu0 0.0
    %597 = vmatpush.msra.mxu0 0.0
    %598 = vmatpush.msra.mxu0 0.0
    %599 = vmatpush.msra.mxu0 0.0
    %600 = vmatpush.msra.mxu0 0.0
    %601 = vmatpush.msra.mxu0 0.0
    %602 = vmatpush.msra.mxu0 %v582
    %603 = vmatmul.f32.gmra.mxu0 %v585
    %v604 = vpop.f32.mrf.mxu0
    %v605 = vadd.f32 0.0, %v604
    %606 = vdwg.mxu0
    %609 = vrot.lane.b32.xlu0 %v579, 24
    %v610 = vpop.permute.xlu0 %609
    %611 = vrot.lane.b32.xlu0 %v605, 24
    %v612 = vpop.permute.xlu0 %611
    %vm615 = vcmask 261312
    %616 = vst.msk [vmem:[#allocation8] sm:$0xff] %vm615, %v610
    %617 = vst.msk [vmem:[#allocation8 + $0x8] sm:$0xff] %vm615, %v612
    // Predicated region
    $region26: #{tpu_custom_call.1} parent=1 // pred_check
      _
    $region27: #{tpu_custom_call.1} parent=1 // pred_check_branch
      %619 = sbr.rel (0) target = $region29
    $region28: #{tpu_custom_call.1} parent=1 // pred_region
      %621 = vsyncadd [#allocation4], 0
      %s622 = sshll.u32 [#allocation8], 4
      %s623 = int_to_ptr.vmem [resolvable:$true] %s622
      %s624 = sshll.u32 %s3, 4
      %s625 = int_to_ptr.hbm [resolvable:$true] %s624
      %630 = dma.vmem_to_hbm [thread:$0]  %s623, 256, %s625, [#allocation4], 128, 128, 8
    $region29: #{tpu_custom_call.1} parent=1 // pred_fallthru
      _
    // Predicated region
    $region30: #{tpu_custom_call.1} parent=1 // pred_check
      _
    $region31: #{tpu_custom_call.1} parent=1 // pred_check_branch
      %632 = sbr.rel (0) target = $region33
    $region32: #{tpu_custom_call.1} parent=1 // pred_region
      %634 = dma.done [#allocation4], 256
    $region33: #{tpu_custom_call.1} parent=1 // pred_fallthru
      _
    %635 = vsyncpa [#allocation3], 1
    %636 = vsyncpa [#allocation6], 1
    %637 = vsyncpa [#allocation4], 1

</llo_original>
